<compile_context>
chip_gen: v6e
topology: v6e:2x2x1
jax: 0.10.0
libtpu: 0.0.40
codegen_flags: <defaults>
</compile_context>

<pallas_src>
import functools

import jax
import jax.numpy as jnp
from jax import lax
from jax.experimental import pallas as pl
from jax.experimental.pallas import tpu as pltpu


def _round_up(x, m):
    return ((x + m - 1) // m) * m


def _dividing_tile(extent, pref):
    """Largest multiple of 128 that is <= pref and divides extent (extent % 128 == 0)."""
    t = max(128, min(pref, extent))
    t = (t // 128) * 128
    while extent % t:
        t -= 128
    return t


def pad_linear_block_params(weight, bias, gamma, beta):
    """Pad parameters once (outside the hot path) to multiples of 128.

    Zero weight rows / zero bias keep padded output features at exactly 0, so
    they can be sliced off after the kernel.
    """
    d_out, d_in = weight.shape
    d_in_p = _round_up(d_in, 128)
    d_out_p = _round_up(d_out, 128)
    if d_in_p != d_in:
        weight = jnp.pad(weight, ((0, 0), (0, d_in_p - d_in)))
    if d_out_p != d_out:
        weight = jnp.pad(weight, ((0, d_out_p - d_out), (0, 0)))
        bias = jnp.pad(bias, (0, d_out_p - d_out))
        gamma = jnp.pad(gamma, (0, d_out_p - d_out), constant_values=1.0)
        beta = jnp.pad(beta, (0, d_out_p - d_out))
    return weight, bias, gamma, beta


def _vmem_footprint(tb, tn, tk, x_bytes, w_bytes, has_dropout):
    """Approximate double-buffered VMEM footprint (bytes) for one grid step."""
    f = 2 * tb * tk * x_bytes          # x block (double-buffered)
    f += 2 * tn * tk * w_bytes         # weight block (double-buffered)
    f += 2 * 3 * 8 * tn * 4            # bias/gamma/beta (sublane-padded)
    f += 2 * tb * tn * 4               # output block (resident + writeback)
    if has_dropout:
        f += 2 * tb * tn * 4           # dropout bits block
    return f + (1 << 20)               # slack for compiler internal scratch


def _linear_block_kernel(*refs, batch_norm, dropout_rate, eps):
    if dropout_rate > 0.0:
        x_ref, w_ref, b_ref, g_ref, bt_ref, rb_ref, o_ref = refs
    else:
        x_ref, w_ref, b_ref, g_ref, bt_ref, o_ref = refs
        rb_ref = None

    k = pl.program_id(2)

    # y_partial = x @ W^T : contract dim 1 of x with dim 1 of weight on the MXU.
    # Inputs may be bf16 (cast in the wrapper); accumulation is always f32.
    partial = lax.dot_general(
        x_ref[...], w_ref[...], (((1,), (1,)), ((), ())),
        preferred_element_type=jnp.float32)

    # Accumulate directly into the f32 output block (constant block index over k).
    @pl.when(k == 0)
    def _():
        o_ref[...] = partial

    @pl.when(k > 0)
    def _():
        o_ref[...] = o_ref[...] + partial

    @pl.when(k == pl.num_programs(2) - 1)
    def _():
        y = o_ref[...] + b_ref[...]            # (tb, tn) + (1, tn)

        if batch_norm:
            # BatchNorm1d, training mode: per-feature batch statistics
            # (biased variance), then affine gamma/beta. The full batch lives
            # inside this block (tb == B), so the stats are exact.
            mean = jnp.mean(y, axis=0, keepdims=True)
            diff = y - mean
            var = jnp.mean(diff * diff, axis=0, keepdims=True)
            y = diff * lax.rsqrt(var + eps) * g_ref[...] + bt_ref[...]
            # TODO(synk): running_mean/running_var momentum update (module
            # state) is not reproduced; only the forward output is.

        if dropout_rate > 0.0:
            # Keep-mask from precomputed random bits: integer compare only.
            thresh = jnp.int32(int(round(dropout_rate * float(1 << 23))))
            bits23 = jnp.bitwise_and(rb_ref[...], jnp.int32(0x7FFFFF))
            keep = bits23 >= thresh
            y = jnp.where(keep, y * jnp.float32(1.0 / (1.0 - dropout_rate)),
                          jnp.float32(0.0))

        o_ref[...] = jnp.maximum(y, 0.0).astype(o_ref.dtype)


def linear_block(x, weight, bias, gamma, beta, dropout_key=None, *,
                 batch_normalization, dropout_rate, eps=1e-5,
                 tn=256, tk=1024, tb=256, use_bf16_matmul=False,
                 out_dim=None):
    """Pallas forward for LinearBlock.

    x:      (B, input_dim) float32
    weight: (output_dim, input_dim) float32 (PyTorch layout; may be pre-padded
            to multiples of 128 via pad_linear_block_params)
    bias, gamma, beta: (output_dim,) float32 (padded consistently with weight)
    dropout_key: jax PRNG key (only used if dropout_rate > 0)
    out_dim: true (unpadded) output dim; defaults to weight.shape[0].
    """
    B, x_d_in = x.shape
    d_out_w, d_in_w = weight.shape
    if out_dim is None:
        out_dim = d_out_w

    # Pad parameters only if not already 128-aligned (hot path: pre-padded).
    if (d_in_w % 128) or (d_out_w % 128):
        weight, bias, gamma, beta = pad_linear_block_params(weight, bias, gamma, beta)
    d_out_p, d_in_p = weight.shape

    has_dropout = float(dropout_rate) > 0.0
    x_bytes = 2 if use_bf16_matmul else 4
    w_bytes = 2 if use_bf16_matmul else 4

    # ---- Tile selection (lane-dense, divides padded extents) ----
    tk = _dividing_tile(d_in_p, tk)     # n_k == 1 whenever d_in_p <= tk pref
    tn = _dividing_tile(d_out_p, tn)
    if batch_normalization:
        tb = B                           # BN needs the whole batch resident
    else:
        tb = B if B <= tb else tb        # tile batch only when it is large

    # ---- VMEM budget (v5e/v6e/v7x aware) ----
    try:
        vmem_cap = int(pltpu.get_tpu_info().vmem_capacity_bytes)
    except Exception:
        vmem_cap = 64 * 1024 * 1024      # conservative (v7x per-core)
    budget = int(0.7 * vmem_cap)

    while _vmem_footprint(tb, tn, tk, x_bytes, w_bytes, has_dropout) > budget:
        if tk > 128:
            tk = _dividing_tile(d_in_p, tk - 128)
        elif tn > 128:
            tn = _dividing_tile(d_out_p, tn - 128)
        elif (not batch_normalization) and tb > 8 and tb % 16 == 0:
            tb = max(8, tb // 2)
        else:
            if batch_normalization:
                raise ValueError(
                    "LinearBlock Pallas kernel: batch_normalization=True keeps "
                    f"the full batch (B={B}) resident in VMEM, exceeding the "
                    f"budget of {budget} bytes on this chip. Reduce the batch.")
            break

    B_p = B if tb == B else _round_up(B, tb)

    # ---- Input prep (x pad is per-call; weight pad was hoisted) ----
    if x_d_in != d_in_p:
        x = jnp.pad(x, ((0, 0), (0, d_in_p - x_d_in)))
    if B_p != B:
        x = jnp.pad(x, ((0, B_p - B), (0, 0)))
    if use_bf16_matmul:
        x = x.astype(jnp.bfloat16)
        weight = weight.astype(jnp.bfloat16)

    b2 = bias.reshape(1, d_out_p)
    g2 = gamma.reshape(1, d_out_p)
    be2 = beta.reshape(1, d_out_p)

    n_b = B_p // tb
    n_j = d_out_p // tn
    n_k = d_in_p // tk
    grid = (n_b, n_j, n_k)

    in_specs = [
        pl.BlockSpec((tb, tk), lambda b, j, k: (b, k)),     # x
        pl.BlockSpec((tn, tk), lambda b, j, k: (j, k)),     # weight (Dout, Din)
        pl.BlockSpec((1, tn), lambda b, j, k: (0, j)),      # bias
        pl.BlockSpec((1, tn), lambda b, j, k: (0, j)),      # gamma
        pl.BlockSpec((1, tn), lambda b, j, k: (0, j)),      # beta
    ]
    inputs = [x, weight, b2, g2, be2]

    if has_dropout:
        rbits = jax.random.bits(dropout_key, (B_p, d_out_p), dtype=jnp.uint32)
        rbits = lax.bitcast_convert_type(rbits, jnp.int32)
        in_specs.append(pl.BlockSpec((tb, tn), lambda b, j, k: (b, j)))
        inputs.append(rbits)

    kernel = functools.partial(
        _linear_block_kernel,
        batch_norm=bool(batch_normalization),
        dropout_rate=float(dropout_rate),
        eps=float(eps),
    )

    # CostEstimate accounts for x re-reads across j and weight re-reads across b.
    bytes_accessed = (n_j * B_p * d_in_p * x_bytes
                      + n_b * d_out_p * d_in_p * w_bytes
                      + B_p * d_out_p * 4
                      + 3 * d_out_p * 4)
    if has_dropout:
        bytes_accessed += B_p * d_out_p * 4
    cost = pl.CostEstimate(
        flops=2 * B_p * d_in_p * d_out_p,
        transcendentals=d_out_p if batch_normalization else 0,
        bytes_accessed=bytes_accessed,
    )

    footprint = _vmem_footprint(tb, tn, tk, x_bytes, w_bytes, has_dropout)
    vmem_limit = int(min(0.9 * vmem_cap, max(2 * footprint, 32 * 1024 * 1024)))

    out_p = pl.pallas_call(
        kernel,
        out_shape=jax.ShapeDtypeStruct((B_p, d_out_p), jnp.float32),
        grid=grid,
        in_specs=in_specs,
        out_specs=pl.BlockSpec((tb, tn), lambda b, j, k: (b, j)),
        compiler_params=pltpu.CompilerParams(
            dimension_semantics=("parallel", "parallel", "arbitrary"),
            vmem_limit_bytes=vmem_limit),
        cost_estimate=cost,
    )(*inputs)

    if B_p != B or d_out_p != out_dim:
        out_p = out_p[:B, :out_dim]
    return out_p


def _jax_reference(x, weight, bias, gamma, beta, *,
                   batch_normalization, eps=1e-5):
    """Pure-JAX reference for linear + BN(train) + ReLU (no dropout)."""
    y = jnp.dot(x, weight.T, precision=lax.Precision.HIGHEST) + bias
    if batch_normalization:
        mean = jnp.mean(y, axis=0, keepdims=True)
        var = jnp.mean((y - mean) ** 2, axis=0, keepdims=True)
        y = (y - mean) / jnp.sqrt(var + eps) * gamma + beta
    return jnp.maximum(y, 0.0)


if __name__ == "__main__":
    # Module configuration (matches LinearBlock(__init__) semantics).
    input_dim = 32
    output_dim = 64
    batch = 8
    dropout_rate = 0.2

    key = jax.random.PRNGKey(0)
    kx, kw, kb, kd = jax.random.split(key, 4)

    # Input
    x = jax.random.normal(kx, (batch, input_dim), dtype=jnp.float32)

    # nn.Linear params: Xavier-uniform weight, default uniform bias.
    xavier_bound = (6.0 / (input_dim + output_dim)) ** 0.5
    weight = jax.random.uniform(kw, (output_dim, input_dim), jnp.float32,
                                minval=-xavier_bound, maxval=xavier_bound)
    bias_bound = 1.0 / (input_dim ** 0.5)
    bias = jax.random.uniform(kb, (output_dim,), jnp.float32,
                              minval=-bias_bound, maxval=bias_bound)

    # BatchNorm1d affine params (PyTorch init: gamma=1, beta=0).
    gamma = jnp.ones((output_dim,), jnp.float32)
    beta = jnp.zeros((output_dim,), jnp.float32)

    # Pre-pad parameters once, outside the hot path (no per-call weight copy).
    w_p, b_p, g_p, be_p = pad_linear_block_params(weight, bias, gamma, beta)

    # 1) BN on, dropout off: deterministic check vs pure-JAX reference.
    out_bn = linear_block(x, w_p, b_p, g_p, be_p, None,
                          batch_normalization=True, dropout_rate=0.0,
                          out_dim=output_dim)
    ref_bn = _jax_reference(x, weight, bias, gamma, beta,
                            batch_normalization=True)
    assert out_bn.shape == ref_bn.shape
    assert jnp.allclose(out_bn, ref_bn, atol=2e-4, rtol=2e-4), "BN path mismatch"

    # 2) BN off, dropout off (exercises the batch-tileable path).
    out_nobn = linear_block(x, w_p, b_p, g_p, be_p, None,
                            batch_normalization=False, dropout_rate=0.0,
                            out_dim=output_dim)
    ref_nobn = _jax_reference(x, weight, bias, gamma, beta,
                              batch_normalization=False)
    assert jnp.allclose(out_nobn, ref_nobn, atol=2e-4, rtol=2e-4), "no-BN mismatch"

    # 3) Full training-mode forward: Linear -> BN -> Dropout -> ReLU.
    out = linear_block(x, w_p, b_p, g_p, be_p, kd,
                       batch_normalization=True, dropout_rate=dropout_rate,
                       out_dim=output_dim)
    jax.block_until_ready(out)
    assert out.shape == (batch, output_dim)
    assert bool(jnp.all(out >= 0.0))  # ReLU post-condition

    print("KERNEL_OK")
</pallas_src>

<mosaic_0001>
module attributes {stable_mosaic.version = 11 : i64} {
  func.func @_linear_block_kernel(%arg0: i32, %arg1: i32, %arg2: i32, %arg3: memref<8x128xf32, #tpu.memory_space<vmem>>, %arg4: memref<128x128xf32, #tpu.memory_space<vmem>>, %arg5: memref<1x128xf32, #tpu.memory_space<vmem>>, %arg6: memref<1x128xf32, #tpu.memory_space<vmem>>, %arg7: memref<1x128xf32, #tpu.memory_space<vmem>>, %arg8: memref<8x128xf32, #tpu.memory_space<vmem>>) attributes {dimension_semantics = [#tpu.dimension_semantics<parallel>, #tpu.dimension_semantics<parallel>, #tpu.dimension_semantics<arbitrary>], iteration_bounds = array<i64: 1, 1, 1>, scalar_prefetch = 0 : i64, scratch_operands = 0 : i64, tpu.core_type = #tpu.core_type<tc>, window_params = [{transform_indices = @transform_0, window_bounds = array<i64: 8, 128>}, {transform_indices = @transform_1, window_bounds = array<i64: 128, 128>}, {transform_indices = @transform_2, window_bounds = array<i64: 1, 128>}, {transform_indices = @transform_3, window_bounds = array<i64: 1, 128>}, {transform_indices = @transform_4, window_bounds = array<i64: 1, 128>}, {transform_indices = @transform_5, window_bounds = array<i64: 8, 128>}]} {
    %c0 = arith.constant 0 : index
    %c0_0 = arith.constant 0 : index
    %0 = vector.load %arg3[%c0, %c0_0] : memref<8x128xf32, #tpu.memory_space<vmem>>, vector<8x128xf32>
    %c0_1 = arith.constant 0 : index
    %c0_2 = arith.constant 0 : index
    %1 = vector.load %arg4[%c0_1, %c0_2] : memref<128x128xf32, #tpu.memory_space<vmem>>, vector<128x128xf32>
    %cst = arith.constant dense<0.000000e+00> : vector<8x128xf32>
    %2 = tpu.matmul %0, %1, %cst {dimension_numbers = #tpu.dot_dimension_numbers<[1], [1], [0], [0], [0, 0, 1, 0], [], []>} : vector<8x128xf32>, vector<128x128xf32>, vector<8x128xf32> -> vector<8x128xf32>
    %c0_i32 = arith.constant 0 : i32
    %3 = arith.cmpi eq, %arg2, %c0_i32 : i32
    %4 = arith.extui %3 : i1 to i32
    %c0_i32_3 = arith.constant 0 : i32
    %5 = arith.cmpi ne, %4, %c0_i32_3 : i32
    scf.if %5 {
      %c0_8 = arith.constant 0 : index
      %c0_9 = arith.constant 0 : index
      %12 = vector.load %arg8[%c0_8, %c0_9] : memref<8x128xf32, #tpu.memory_space<vmem>>, vector<8x128xf32>
      tpu.vector_store %arg8[%c0_8, %c0_9], %2 {strides = array<i32>} : memref<8x128xf32, #tpu.memory_space<vmem>>, vector<8x128xf32>,
    } else {
    }
    %c0_i32_4 = arith.constant 0 : i32
    %6 = arith.cmpi sgt, %arg2, %c0_i32_4 : i32
    %7 = arith.extui %6 : i1 to i32
    %c0_i32_5 = arith.constant 0 : i32
    %8 = arith.cmpi ne, %7, %c0_i32_5 : i32
    scf.if %8 {
      %c0_8 = arith.constant 0 : index
      %c0_9 = arith.constant 0 : index
      %12 = vector.load %arg8[%c0_8, %c0_9] : memref<8x128xf32, #tpu.memory_space<vmem>>, vector<8x128xf32>
      %13 = arith.addf %12, %2 : vector<8x128xf32>
      %c0_10 = arith.constant 0 : index
      %c0_11 = arith.constant 0 : index
      %14 = vector.load %arg8[%c0_10, %c0_11] : memref<8x128xf32, #tpu.memory_space<vmem>>, vector<8x128xf32>
      tpu.vector_store %arg8[%c0_10, %c0_11], %13 {strides = array<i32>} : memref<8x128xf32, #tpu.memory_space<vmem>>, vector<8x128xf32>,
    } else {
    }
    %c0_i32_6 = arith.constant 0 : i32
    %9 = arith.cmpi eq, %arg2, %c0_i32_6 : i32
    %10 = arith.extui %9 : i1 to i32
    %c0_i32_7 = arith.constant 0 : i32
    %11 = arith.cmpi ne, %10, %c0_i32_7 : i32
    scf.if %11 {
      %c0_8 = arith.constant 0 : index
      %c0_9 = arith.constant 0 : index
      %12 = vector.load %arg8[%c0_8, %c0_9] : memref<8x128xf32, #tpu.memory_space<vmem>>, vector<8x128xf32>
      %c0_10 = arith.constant 0 : index
      %c0_11 = arith.constant 0 : index
      %13 = vector.load %arg5[%c0_10, %c0_11] : memref<1x128xf32, #tpu.memory_space<vmem>>, vector<1x128xf32>
      %14 = vector.broadcast %13 : vector<1x128xf32> to vector<8x128xf32>
      %15 = arith.addf %12, %14 : vector<8x128xf32>
      %cst_12 = arith.constant dense<0.000000e+00> : vector<128xf32>
      %16 = vector.multi_reduction <add>, %15, %cst_12 [0] : vector<8x128xf32> to vector<128xf32>
      %17 = vector.shape_cast %16 : vector<128xf32> to vector<1x128xf32>
      %cst_13 = arith.constant 8.000000e+00 : f32
      %18 = vector.broadcast %cst_13 : f32 to vector<1x128xf32>
      %19 = arith.divf %17, %18 : vector<1x128xf32>
      %20 = vector.broadcast %19 : vector<1x128xf32> to vector<8x128xf32>
      %21 = arith.subf %15, %20 : vector<8x128xf32>
      %22 = arith.mulf %21, %21 : vector<8x128xf32>
      %cst_14 = arith.constant dense<0.000000e+00> : vector<128xf32>
      %23 = vector.multi_reduction <add>, %22, %cst_14 [0] : vector<8x128xf32> to vector<128xf32>
      %24 = vector.shape_cast %23 : vector<128xf32> to vector<1x128xf32>
      %cst_15 = arith.constant 8.000000e+00 : f32
      %25 = vector.broadcast %cst_15 : f32 to vector<1x128xf32>
      %26 = arith.divf %24, %25 : vector<1x128xf32>
      %cst_16 = arith.constant 9.99999974E-6 : f32
      %27 = vector.broadcast %cst_16 : f32 to vector<1x128xf32>
      %28 = arith.addf %26, %27 : vector<1x128xf32>
      %29 = math.rsqrt %28 : vector<1x128xf32>
      %30 = vector.broadcast %29 : vector<1x128xf32> to vector<8x128xf32>
      %31 = arith.mulf %21, %30 : vector<8x128xf32>
      %c0_17 = arith.constant 0 : index
      %c0_18 = arith.constant 0 : index
      %32 = vector.load %arg6[%c0_17, %c0_18] : memref<1x128xf32, #tpu.memory_space<vmem>>, vector<1x128xf32>
      %33 = vector.broadcast %32 : vector<1x128xf32> to vector<8x128xf32>
      %34 = arith.mulf %31, %33 : vector<8x128xf32>
      %c0_19 = arith.constant 0 : index
      %c0_20 = arith.constant 0 : index
      %35 = vector.load %arg7[%c0_19, %c0_20] : memref<1x128xf32, #tpu.memory_space<vmem>>, vector<1x128xf32>
      %36 = vector.broadcast %35 : vector<1x128xf32> to vector<8x128xf32>
      %37 = arith.addf %34, %36 : vector<8x128xf32>
      %cst_21 = arith.constant 0.000000e+00 : f32
      %38 = vector.broadcast %cst_21 : f32 to vector<8x128xf32>
      %39 = arith.maximumf %37, %38 : vector<8x128xf32>
      %c0_22 = arith.constant 0 : index
      %c0_23 = arith.constant 0 : index
      %40 = vector.load %arg8[%c0_22, %c0_23] : memref<8x128xf32, #tpu.memory_space<vmem>>, vector<8x128xf32>
      tpu.vector_store %arg8[%c0_22, %c0_23], %39 {strides = array<i32>} : memref<8x128xf32, #tpu.memory_space<vmem>>, vector<8x128xf32>,
    } else {
    }
    return
  }
  func.func @transform_0(%arg0: i32, %arg1: i32, %arg2: i32) -> (i32, i32) {
    %c0_i32 = arith.constant 0 : i32
    return %arg0, %arg2 : i32, i32
  }
  func.func @transform_1(%arg0: i32, %arg1: i32, %arg2: i32) -> (i32, i32) {
    %c0_i32 = arith.constant 0 : i32
    return %arg1, %arg2 : i32, i32
  }
  func.func @transform_2(%arg0: i32, %arg1: i32, %arg2: i32) -> (i32, i32) {
    %c0_i32 = arith.constant 0 : i32
    %c0_i32_0 = arith.constant 0 : i32
    return %c0_i32, %arg1 : i32, i32
  }
  func.func @transform_3(%arg0: i32, %arg1: i32, %arg2: i32) -> (i32, i32) {
    %c0_i32 = arith.constant 0 : i32
    %c0_i32_0 = arith.constant 0 : i32
    return %c0_i32, %arg1 : i32, i32
  }
  func.func @transform_4(%arg0: i32, %arg1: i32, %arg2: i32) -> (i32, i32) {
    %c0_i32 = arith.constant 0 : i32
    %c0_i32_0 = arith.constant 0 : i32
    return %c0_i32, %arg1 : i32, i32
  }
  func.func @transform_5(%arg0: i32, %arg1: i32, %arg2: i32) -> (i32, i32) {
    %c0_i32 = arith.constant 0 : i32
    return %arg0, %arg1 : i32, i32
  }
}

</mosaic_0001>

<llo_original>
// kernel: tpu_custom_call.1
$region0: #{tpu_custom_call.1}
  #allocation0 [shape = 'u32[]', space=smem, size = 0x4, offset = 0x4, fixed_abs, tag = 'smem constant byte address 0x4 - core index']
  #allocation1 [shape = 'u32[144,128]{1,0:T(1,128)}', space=vmem, size = 0x12000, scoped, tag = 'internal scratch']
  %s0 = inlined_call_operand.hbm [shape: f32[8,128], index: 0, kind: input, shape index: {}]
  %s1 = inlined_call_operand.hbm [shape: f32[128,128], index: 1, kind: input, shape index: {}]
  %s2 = inlined_call_operand.vmem [shape: f32[1,128], index: 2, kind: input, shape index: {}]
  %s3 = inlined_call_operand.vmem [shape: f32[1,128], index: 3, kind: input, shape index: {}]
  %s4 = inlined_call_operand.vmem [shape: f32[1,128], index: 4, kind: input, shape index: {}]
  %s5 = inlined_call_operand.hbm [shape: f32[8,128], index: 5, kind: output, shape index: {}]
  %s6 = sld [smem:[#allocation0]]
  $region50: #{tpu_custom_call.1} parent=0
    _
  %s8 = ssub.s32 1, %s6
  %s9 = scalar_select 0, %s8, %s6
  $region1: #{tpu_custom_call.1} parent=0
    #allocation2 [shape = 'u8[4096]{0}', space=vmem, size = 0x1000, scoped, tag = 'input window, operand 0, single buffered']
    #allocation3 [shape = 's32[1]{0}', space=sflag, size = 0x4, scoped, tag = 'scoped memory for tpu_custom_call.1']
    #allocation4 [shape = 's32[1]{0}', space=sflag, size = 0x4, scoped, tag = 'scoped memory for tpu_custom_call.1']
    #allocation5 [shape = 'u8[65536]{0}', space=vmem, size = 0x10000, scoped, tag = 'input window, operand 1, single buffered']
    #allocation6 [shape = 's32[1]{0}', space=sflag, size = 0x4, scoped, tag = 'scoped memory for tpu_custom_call.1']
    #allocation7 [shape = 'u8[4096]{0}', space=vmem, size = 0x1000, scoped, tag = 'output window, operand 0, single buffered']
    %10 = vsyncpa [#allocation3], 0
    %11 = vsyncpa [#allocation6], 0
    %12 = vsyncpa [#allocation4], 0
    // Predicated region
    $region2: #{tpu_custom_call.1} parent=1 // pred_check
      _
    $region3: #{tpu_custom_call.1} parent=1 // pred_check_branch
      %14 = sbr.rel (0) target = $region5
    $region4: #{tpu_custom_call.1} parent=1 // pred_region
      %s16 = ssub.s32 128, 128
      %17 = vsyncadd [#allocation3], %s16
      %s19 = sshll.u32 [#allocation2], 4
      %s20 = int_to_ptr.vmem [resolvable:$true] %s19
      %22 = dma.hbm_to_vmem [thread:$0]  %s0, 128, %s20, [#allocation3]
    $region5: #{tpu_custom_call.1} parent=1 // pred_fallthru
      _
    // Predicated region
    $region6: #{tpu_custom_call.1} parent=1 // pred_check
      _
    $region7: #{tpu_custom_call.1} parent=1 // pred_check_branch
      %24 = sbr.rel (0) target = $region9
    $region8: #{tpu_custom_call.1} parent=1 // pred_region
      %s26 = ssub.s32 2048, 2048
      %27 = vsyncadd [#allocation6], %s26
      %s28 = sshll.u32 [#allocation5], 4
      %s29 = int_to_ptr.vmem [resolvable:$true] %s28
      %34 = dma.hbm_to_vmem [thread:$0]  %s1, 2048, %s29, [#allocation6], 128, 128, 8
    $region9: #{tpu_custom_call.1} parent=1 // pred_fallthru
      _
    // Predicated region
    $region10: #{tpu_custom_call.1} parent=1 // pred_check
      _
    $region11: #{tpu_custom_call.1} parent=1 // pred_check_branch
      %36 = sbr.rel (0) target = $region13
    $region12: #{tpu_custom_call.1} parent=1 // pred_region
      _
    $region13: #{tpu_custom_call.1} parent=1 // pred_fallthru
      _
    // Predicated region
    $region14: #{tpu_custom_call.1} parent=1 // pred_check
      _
    $region15: #{tpu_custom_call.1} parent=1 // pred_check_branch
      %38 = sbr.rel (0) target = $region17
    $region16: #{tpu_custom_call.1} parent=1 // pred_region
      _
    $region17: #{tpu_custom_call.1} parent=1 // pred_fallthru
      _
    // Predicated region
    $region18: #{tpu_custom_call.1} parent=1 // pred_check
      _
    $region19: #{tpu_custom_call.1} parent=1 // pred_check_branch
      %40 = sbr.rel (0) target = $region21
    $region20: #{tpu_custom_call.1} parent=1 // pred_region
      _
    $region21: #{tpu_custom_call.1} parent=1 // pred_fallthru
      _
    // Predicated region
    $region22: #{tpu_custom_call.1} parent=1 // pred_check
      _
    $region23: #{tpu_custom_call.1} parent=1 // pred_check_branch
      %42 = sbr.rel (0) target = $region25
    $region24: #{tpu_custom_call.1} parent=1 // pred_region
      %43 = dma.done [#allocation3], 128
    $region25: #{tpu_custom_call.1} parent=1 // pred_fallthru
      _
    // Predicated region
    $region26: #{tpu_custom_call.1} parent=1 // pred_check
      _
    $region27: #{tpu_custom_call.1} parent=1 // pred_check_branch
      %45 = sbr.rel (0) target = $region29
    $region28: #{tpu_custom_call.1} parent=1 // pred_region
      %46 = dma.done [#allocation6], 2048
    $region29: #{tpu_custom_call.1} parent=1 // pred_fallthru
      _
    %v47 = vld [vmem:[#allocation2] sm:$0xff]
    %v48 = vld [vmem:[#allocation5] sm:$0xff]
    %v49 = vld [vmem:[#allocation5 + $0x8] sm:$0xff]
    %v50 = vld [vmem:[#allocation5 + $0x10] sm:$0xff]
    %v51 = vld [vmem:[#allocation5 + $0x18] sm:$0xff]
    %v52 = vld [vmem:[#allocation5 + $0x20] sm:$0xff]
    %v53 = vld [vmem:[#allocation5 + $0x28] sm:$0xff]
    %v54 = vld [vmem:[#allocation5 + $0x30] sm:$0xff]
    %v55 = vld [vmem:[#allocation5 + $0x38] sm:$0xff]
    %v56 = vld [vmem:[#allocation5 + $0x40] sm:$0xff]
    %v57 = vld [vmem:[#allocation5 + $0x48] sm:$0xff]
    %v58 = vld [vmem:[#allocation5 + $0x50] sm:$0xff]
    %v59 = vld [vmem:[#allocation5 + $0x58] sm:$0xff]
    %v60 = vld [vmem:[#allocation5 + $0x60] sm:$0xff]
    %v61 = vld [vmem:[#allocation5 + $0x68] sm:$0xff]
    %v62 = vld [vmem:[#allocation5 + $0x70] sm:$0xff]
    %v63 = vld [vmem:[#allocation5 + $0x78] sm:$0xff]
    %64 = vmatprep.subr.mxu0 0.0
    %65 = vmatpush1.xpose.msra.mxu0 %v63
    %66 = vmatprep.subr.mxu0 0.0
    %67 = vmatpush1.xpose.msra.mxu0 %v62
    %68 = vmatprep.subr.mxu0 0.0
    %69 = vmatpush1.xpose.msra.mxu0 %v61
    %70 = vmatprep.subr.mxu0 0.0
    %71 = vmatpush1.xpose.msra.mxu0 %v60
    %72 = vmatprep.subr.mxu0 0.0
    %73 = vmatpush1.xpose.msra.mxu0 %v59
    %74 = vmatprep.subr.mxu0 0.0
    %75 = vmatpush1.xpose.msra.mxu0 %v58
    %76 = vmatprep.subr.mxu0 0.0
    %77 = vmatpush1.xpose.msra.mxu0 %v57
    %78 = vmatprep.subr.mxu0 0.0
    %79 = vmatpush1.xpose.msra.mxu0 %v56
    %80 = vmatprep.subr.mxu0 0.0
    %81 = vmatpush1.xpose.msra.mxu0 %v55
    %82 = vmatprep.subr.mxu0 0.0
    %83 = vmatpush1.xpose.msra.mxu0 %v54
    %84 = vmatprep.subr.mxu0 0.0
    %85 = vmatpush1.xpose.msra.mxu0 %v53
    %86 = vmatprep.subr.mxu0 0.0
    %87 = vmatpush1.xpose.msra.mxu0 %v52
    %88 = vmatprep.subr.mxu0 0.0
    %89 = vmatpush1.xpose.msra.mxu0 %v51
    %90 = vmatprep.subr.mxu0 0.0
    %91 = vmatpush1.xpose.msra.mxu0 %v50
    %92 = vmatprep.subr.mxu0 0.0
    %93 = vmatpush1.xpose.msra.mxu0 %v49
    %94 = vmatprep.subr.mxu0 0.0
    %95 = vmatpush1.xpose.msra.mxu0 %v48
    %96 = vmatprep.subr.mxu0 0.0
    %97 = vmatpush2.xpose.msra.mxu0 0.0
    %98 = vmatprep.subr.mxu0 0.0
    %99 = vmatpush2.xpose.msra.mxu0 0.0
    %100 = vmatprep.subr.mxu0 0.0
    %101 = vmatpush2.xpose.msra.mxu0 0.0
    %102 = vmatprep.subr.mxu0 0.0
    %103 = vmatpush2.xpose.msra.mxu0 0.0
    %104 = vmatprep.subr.mxu0 0.0
    %105 = vmatpush2.xpose.msra.mxu0 0.0
    %106 = vmatprep.subr.mxu0 0.0
    %107 = vmatpush2.xpose.msra.mxu0 0.0
    %108 = vmatprep.subr.mxu0 0.0
    %109 = vmatpush2.xpose.msra.mxu0 0.0
    %110 = vmatprep.subr.mxu0 0.0
    %111 = vmatpush2.xpose.msra.mxu0 0.0
    %112 = vmatprep.subr.mxu0 0.0
    %113 = vmatpush2.xpose.msra.mxu0 0.0
    %114 = vmatprep.subr.mxu0 0.0
    %115 = vmatpush2.xpose.msra.mxu0 0.0
    %116 = vmatprep.subr.mxu0 0.0
    %117 = vmatpush2.xpose.msra.mxu0 0.0
    %118 = vmatprep.subr.mxu0 0.0
    %119 = vmatpush2.xpose.msra.mxu0 0.0
    %120 = vmatprep.subr.mxu0 0.0
    %121 = vmatpush2.xpose.msra.mxu0 0.0
    %122 = vmatprep.subr.mxu0 0.0
    %123 = vmatpush2.xpose.msra.mxu0 0.0
    %124 = vmatprep.subr.mxu0 0.0
    %125 = vmatpush2.xpose.msra.mxu0 0.0
    %126 = vmatprep.subr.mxu0 0.0
    %127 = vmatpush2.xpose.msra.mxu0 0.0
    %128 = vmatprep.mubr.f32.mxu0 0.0
    %129 = vmatmul.mubr.f32.gmra.mxu0 %v47
    %v130 = vpop.f32.mrf.mxu0
    %v131 = vadd.f32 0.0, %v130
    %v132 = vpop.f32.mrf.mxu0
    %133 = vdwg.mxu0
    %p134 = scmp.eq.s32.totalorder 0, 0
    // Predicated region
    $region30: #{tpu_custom_call.1} parent=1 // pred_check
      %p135 = pneg %p134
    $region31: #{tpu_custom_call.1} parent=1 // pred_check_branch
      %137 = sbr.rel (%p135) target = $region33
    $region32: #{tpu_custom_call.1} parent=1 // pred_region
      %138 = vst [vmem:[#allocation7] sm:$0xff] %v131
    $region33: #{tpu_custom_call.1} parent=1 // pred_fallthru
      _
    %p139 = scmp.gt.s32.totalorder 0, 0
    // Predicated region
    $region34: #{tpu_custom_call.1} parent=1 // pred_check
      %p140 = pneg %p139
    $region35: #{tpu_custom_call.1} parent=1 // pred_check_branch
      %142 = sbr.rel (%p140) target = $region37
    $region36: #{tpu_custom_call.1} parent=1 // pred_region
      %v143 = vld [vmem:[#allocation7] sm:$0xff]
      %v144 = vadd.f32 %v143, %v131
      %145 = vst [vmem:[#allocation7] sm:$0xff] %v144
    $region37: #{tpu_custom_call.1} parent=1 // pred_fallthru
      _
    // Predicated region
    $region38: #{tpu_custom_call.1} parent=1 // pred_check
      %p146 = pneg %p134
    $region39: #{tpu_custom_call.1} parent=1 // pred_check_branch
      %148 = sbr.rel (%p146) target = $region41
    $region40: #{tpu_custom_call.1} parent=1 // pred_region
      %v149 = vld [vmem:[#allocation7] sm:$0xff]
      %v150 = vld [vmem:[%s2] sm:$0x1]
      %v152 = vlaneseq
      %v153 = vshrl.u32 %v152, 7
      %v154 = vsub.s32 0, %v153
      %v155 = vrot.slane %v150, %v154
      %v157 = vadd.f32 %v149, %v155
      %v158 = vrot.slane %v157, 4
      %v159 = vadd.f32 %v157, %v158
      %v160 = vrot.slane %v159, 2
      %v161 = vadd.f32 %v159, %v160
      %v162 = vrot.slane %v161, 1
      %v163 = vadd.f32 %v161, %v162
      %v164 = vrcp.pop 8.0
      %v165 = vmul.f32 %v163, %v164
      %v166 = vsub.f32 %v157, %v165
      %v167 = vmul.f32 %v166, %v166
      %v168 = vrot.slane %v167, 4
      %v169 = vadd.f32 %v167, %v168
      %v170 = vrot.slane %v169, 2
      %v171 = vadd.f32 %v169, %v170
      %v172 = vrot.slane %v171, 1
      %v173 = vadd.f32 %v171, %v172
      %v174 = vmul.f32 %v173, %v164
      %v175 = vadd.f32 %v174, 1e-05
      %v176 = vrsqrt.pop %v175
      %v177 = vmul.f32 %v166, %v176
      %v178 = vld [vmem:[%s3] sm:$0x1]
      %v180 = vlaneseq
      %v181 = vshrl.u32 %v180, 7
      %v182 = vsub.s32 0, %v181
      %v183 = vrot.slane %v178, %v182
      %v185 = vmul.f32 %v177, %v183
      %v186 = vld [vmem:[%s4] sm:$0x1]
      %v188 = vlaneseq
      %v189 = vshrl.u32 %v188, 7
      %v190 = vsub.s32 0, %v189
      %v191 = vrot.slane %v186, %v190
      %v193 = vadd.f32 %v185, %v191
      %v194 = vmax.f32 %v193, 0.0
      %195 = vst [vmem:[#allocation7] sm:$0xff] %v194
    $region41: #{tpu_custom_call.1} parent=1 // pred_fallthru
      _
    // Predicated region
    $region42: #{tpu_custom_call.1} parent=1 // pred_check
      _
    $region43: #{tpu_custom_call.1} parent=1 // pred_check_branch
      %197 = sbr.rel (0) target = $region45
    $region44: #{tpu_custom_call.1} parent=1 // pred_region
      %s199 = ssub.s32 128, 128
      %200 = vsyncadd [#allocation4], %s199
      %s202 = sshll.u32 [#allocation7], 4
      %s203 = int_to_ptr.vmem [resolvable:$true] %s202
      %205 = dma.vmem_to_hbm [thread:$0]  %s203, 128, %s5, [#allocation4]
    $region45: #{tpu_custom_call.1} parent=1 // pred_fallthru
      _
    // Predicated region
    $region46: #{tpu_custom_call.1} parent=1 // pred_check
      _
    $region47: #{tpu_custom_call.1} parent=1 // pred_check_branch
      %207 = sbr.rel (0) target = $region49
    $region48: #{tpu_custom_call.1} parent=1 // pred_region
      %208 = dma.done [#allocation4], 128
    $region49: #{tpu_custom_call.1} parent=1 // pred_fallthru
      _
    %209 = vsyncpa [#allocation3], 1
    %210 = vsyncpa [#allocation6], 1
    %211 = vsyncpa [#allocation4], 1

</llo_original>
